<compile_context>
chip_gen: v7x
topology: tpu7x:2x2x1
jax: 0.10.0
libtpu: 0.0.40
codegen_flags: <defaults>
</compile_context>

<pallas_src>
import functools

import jax
import jax.numpy as jnp
from jax import lax
from jax.experimental import pallas as pl
from jax.experimental.pallas import tpu as pltpu

# ---------------- model dims (module hard-codes 256 / 128 hidden) -----------
INPUT_DIM = 64
HIDDEN1 = 256
HIDDEN2 = 128
NUM_CLASSES = 16
PADDED_C = 128            # lane-dense class axis (multiple of 128)
BATCH = 8
EPS = 1e-12               # F.normalize default eps


# ------------------------------ kernel --------------------------------------
def spectralnet_dismax_kernel(x_ref, w1_ref, b1_ref, wf_ref, bf_ref, pnt_ref,
                              out_ref, *, neg_scale):
    # ---- fc1 + ReLU : bf16 operands on the MXU, f32 accumulation -----------
    x16 = x_ref[...].astype(jnp.bfloat16)
    h1 = jnp.dot(x16, w1_ref[...], preferred_element_type=jnp.float32) + b1_ref[...]
    h1 = jnp.maximum(h1, 0.0)

    # ---- Attention over a length-1 sequence --------------------------------
    # softmax over a single score == 1.0 exactly, so attention_output == value;
    # value projection and fc2 are algebraically folded into (wf, bf).
    h2 = jnp.dot(h1.astype(jnp.bfloat16), wf_ref[...],
                 preferred_element_type=jnp.float32) + bf_ref[...]
    h2 = jnp.maximum(h2, 0.0)

    # ---- DisMaxLossFirstPart ------------------------------------------------
    # F.normalize(features): x / max(||x||, eps)  (rsqrt + multiply, EUP slot)
    sumsq = jnp.sum(h2 * h2, axis=-1, keepdims=True)           # (bb, 1)
    inv = lax.rsqrt(jnp.maximum(sumsq, EPS * EPS))
    f = h2 * inv                                                # (bb, 128)
    fsq = sumsq * (inv * inv)   # ||f||^2 (==1 unless degenerate all-zero row)

    # ||f - pn||/sqrt(2) == sqrt(max((||f||^2 + 1 - 2 f.pn)/2, 0)), with
    # ||pn||^2 == 1 (prototypes pre-normalized host-side).  Padded lanes
    # (>= NUM_CLASSES) hold zero prototypes; they are masked out of the mean
    # and sliced away by the wrapper.
    g = jnp.dot(f, pnt_ref[...], preferred_element_type=jnp.float32)  # (bb, 128)
    d2 = jnp.maximum(0.5 * (fsq + 1.0 - 2.0 * g), 0.0)
    dist = jnp.sqrt(d2)

    lane = lax.broadcasted_iota(jnp.int32, (1, PADDED_C), 1)
    mean_dist = jnp.sum(jnp.where(lane < NUM_CLASSES, dist, 0.0),
                        axis=1, keepdims=True) * (1.0 / NUM_CLASSES)

    # logits = -|s| * (dist + mean(dist)); temperature == 1.0
    out_ref[...] = neg_scale * (dist + mean_dist)


# ------------------------------ wrapper --------------------------------------
def _select_block_b(B):
    """Batch-tile size: single step when small; otherwise big, divisor tiles."""
    if B <= 512 or B % 8:
        return B                              # single, padding-free step
    half = B // 2
    if half % 8 == 0 and half <= 1024:
        return half                           # 2 steps -> both v7x TCs busy
    for cand in (1024, 512, 256, 128, 64, 32, 16, 8):
        if B % cand == 0:
            return cand
    return B


def spectralnet_dismax_forward(x, kparams, *, block_b=None):
    w1t, b1, wf, bf, pnt, neg_scale = kparams
    B = x.shape[0]
    if block_b is None:
        block_b = _select_block_b(B)
    assert B % block_b == 0 and (block_b == B or block_b % 8 == 0)
    grid = (B // block_b,)

    in_specs = [
        pl.BlockSpec((block_b, INPUT_DIM), lambda i: (i, 0)),      # x (batch-tiled)
        pl.BlockSpec((INPUT_DIM, HIDDEN1), lambda i: (0, 0)),      # w1t  (bf16, replicated)
        pl.BlockSpec((1, HIDDEN1), lambda i: (0, 0)),              # b1
        pl.BlockSpec((HIDDEN1, HIDDEN2), lambda i: (0, 0)),        # fused Wv@W2 (bf16)
        pl.BlockSpec((1, HIDDEN2), lambda i: (0, 0)),              # fused bias
        pl.BlockSpec((HIDDEN2, PADDED_C), lambda i: (0, 0)),       # padded prototypes^T
    ]
    out_spec = pl.BlockSpec((block_b, PADDED_C), lambda i: (i, 0))

    # Advisory cost estimate so XLA can overlap the call at small B.
    flops = 2 * B * (INPUT_DIM * HIDDEN1 + HIDDEN1 * HIDDEN2 + HIDDEN2 * PADDED_C)
    transcendentals = B * (1 + PADDED_C)                           # rsqrt + sqrt
    param_bytes = sum(int(a.size) * a.dtype.itemsize for a in (w1t, b1, wf, bf, pnt))
    bytes_accessed = int(x.size) * x.dtype.itemsize + param_bytes + B * PADDED_C * 4

    out = pl.pallas_call(
        functools.partial(spectralnet_dismax_kernel, neg_scale=neg_scale),
        out_shape=jax.ShapeDtypeStruct((B, PADDED_C), jnp.float32),
        grid_spec=pltpu.PrefetchScalarGridSpec(
            num_scalar_prefetch=0,
            grid=grid,
            in_specs=in_specs,
            out_specs=out_spec,
        ),
        compiler_params=pltpu.CompilerParams(
            dimension_semantics=("parallel",)),
        cost_estimate=pl.CostEstimate(
            flops=flops,
            transcendentals=transcendentals,
            bytes_accessed=bytes_accessed),
    )(x, w1t, b1, wf, bf, pnt)

    return out[:, :NUM_CLASSES]               # drop lane-padding of class axis


# ------------------------------ parameters -----------------------------------
def init_params(key):
    """Deterministic synthetic parameters (shapes from the module __init__)."""
    ks = jax.random.split(key, 12)

    def lin(kw, kb, fan_in, fan_out):
        # weight stored transposed: (in_features, out_features)
        w = jax.random.normal(kw, (fan_in, fan_out), jnp.float32) * (1.0 / jnp.sqrt(fan_in))
        b = jax.random.normal(kb, (1, fan_out), jnp.float32) * 0.01
        return w, b

    w1t, b1 = lin(ks[0], ks[1], INPUT_DIM, HIDDEN1)
    wqt, bq = lin(ks[2], ks[3], HIDDEN1, HIDDEN1)
    wkt, bk = lin(ks[4], ks[5], HIDDEN1, HIDDEN1)
    wvt, bv = lin(ks[6], ks[7], HIDDEN1, HIDDEN1)
    w2t, b2 = lin(ks[8], ks[9], HIDDEN1, HIDDEN2)
    # DisMax: prototypes ~ N(0, 1), distance_scale = 1.0
    proto = jax.random.normal(ks[10], (NUM_CLASSES, HIDDEN2), jnp.float32)
    dscale = jnp.ones((1,), jnp.float32)
    return (w1t, b1, wqt, bq, wkt, bk, wvt, bv, w2t, b2, proto, dscale)


def prepare_kernel_params(params):
    """Host-side (loop-invariant) folding of the module parameters."""
    (w1t, b1, wqt, bq, wkt, bk, wvt, bv, w2t, b2, proto, dscale) = params
    # softmax over a length-1 sequence == 1 -> q/k never affect the output;
    # fold the value projection into fc2 (f32 host-side, then bf16 for DMA/MXU).
    wf = wvt @ w2t                                   # (256, 128)
    bf = bv @ w2t + b2                               # (1, 128)
    # F.normalize(prototypes) host-side; transpose and zero-pad the class axis
    # to a full 128-lane slab for lane-dense stores / reductions.
    pn = proto / jnp.maximum(jnp.linalg.norm(proto, axis=-1, keepdims=True), EPS)
    pnt = jnp.zeros((HIDDEN2, PADDED_C), jnp.float32).at[:, :NUM_CLASSES].set(pn.T)
    # Fold |distance_scale| into a single static scalar (drops the SMEM operand).
    neg_scale = float(-jnp.abs(dscale[0]))
    return (w1t.astype(jnp.bfloat16), b1, wf.astype(jnp.bfloat16), bf, pnt, neg_scale)


# ------------------------------ references -----------------------------------
def folded_reference(x, kparams):
    """Plain-JAX replica of the exact kernel math (same bf16 folded params)."""
    w1t, b1, wf, bf, pnt, neg_scale = kparams
    h1 = jnp.maximum(
        jnp.dot(x.astype(jnp.bfloat16), w1t, preferred_element_type=jnp.float32) + b1, 0.0)
    h2 = jnp.maximum(
        jnp.dot(h1.astype(jnp.bfloat16), wf, preferred_element_type=jnp.float32) + bf, 0.0)
    sumsq = jnp.sum(h2 * h2, axis=-1, keepdims=True)
    inv = lax.rsqrt(jnp.maximum(sumsq, EPS * EPS))
    f = h2 * inv
    fsq = sumsq * (inv * inv)
    g = jnp.dot(f, pnt[:, :NUM_CLASSES], preferred_element_type=jnp.float32)
    dist = jnp.sqrt(jnp.maximum(0.5 * (fsq + 1.0 - 2.0 * g), 0.0))
    return neg_scale * (dist + jnp.mean(dist, axis=1, keepdims=True))


def reference_forward(x, params):
    """Full-f32 plain-JAX reference mirroring the PyTorch module."""
    (w1t, b1, wqt, bq, wkt, bk, wvt, bv, w2t, b2, proto, dscale) = params
    h1 = jax.nn.relu(x @ w1t + b1)
    x1 = h1[:, None, :]                                        # unsqueeze(1)
    q = x1 @ wqt + bq
    k = x1 @ wkt + bk
    v = x1 @ wvt + bv
    scores = jnp.matmul(q, jnp.swapaxes(k, -2, -1)) / jnp.sqrt(float(HIDDEN1))
    w = jax.nn.softmax(scores, axis=-1)
    attn = jnp.matmul(w, v)[:, 0, :]                           # squeeze(1)
    h2 = jax.nn.relu(attn @ w2t + b2)
    f = h2 / jnp.maximum(jnp.linalg.norm(h2, axis=-1, keepdims=True), EPS)
    pn = proto / jnp.maximum(jnp.linalg.norm(proto, axis=-1, keepdims=True), EPS)
    dist = jnp.sqrt(jnp.sum((f[:, None, :] - pn[None, :, :]) ** 2, axis=-1)) / jnp.sqrt(2.0)
    iso = jnp.abs(dscale[0]) * dist
    return -(iso + jnp.mean(iso, axis=1, keepdims=True))       # temperature = 1.0


# ------------------------------ main ------------------------------------------
if __name__ == "__main__":
    key = jax.random.PRNGKey(0)
    k_x, k_p = jax.random.split(key)
    x = jax.random.normal(k_x, (BATCH, INPUT_DIM), jnp.float32)
    params = init_params(k_p)
    kparams = prepare_kernel_params(params)

    out = spectralnet_dismax_forward(x, kparams)
    out = jax.block_until_ready(out)
    assert out.shape == (BATCH, NUM_CLASSES)
    assert bool(jnp.all(jnp.isfinite(out)))

    # Tight check: kernel vs. an identically-folded bf16 JAX replica
    # (validates the Pallas implementation itself).
    ref_bf16 = folded_reference(x, kparams)
    assert jnp.allclose(out, ref_bf16, atol=1e-4, rtol=1e-4), \
        "mismatch vs folded bf16 JAX reference"

    # Loose check: kernel vs. the full f32 module-mirroring reference
    # (tolerance accounts for the bf16 weight/activation cast).
    ref_f32 = reference_forward(x, params)
    assert jnp.allclose(out, ref_f32, atol=3e-2, rtol=3e-2), \
        "mismatch vs full-precision JAX reference"

    print("KERNEL_OK")
</pallas_src>

<mosaic_0001>
module attributes {stable_mosaic.version = 11 : i64} {
  func.func @spectralnet_dismax_kernel(%arg0: i32, %arg1: memref<8x64xf32, #tpu.memory_space<vmem>>, %arg2: memref<64x256xbf16, #tpu.memory_space<vmem>>, %arg3: memref<1x256xf32, #tpu.memory_space<vmem>>, %arg4: memref<256x128xbf16, #tpu.memory_space<vmem>>, %arg5: memref<1x128xf32, #tpu.memory_space<vmem>>, %arg6: memref<128x128xf32, #tpu.memory_space<vmem>>, %arg7: memref<8x128xf32, #tpu.memory_space<vmem>>) attributes {dimension_semantics = [#tpu.dimension_semantics<parallel>], iteration_bounds = array<i64: 1>, scalar_prefetch = 0 : i64, scratch_operands = 0 : i64, tpu.core_type = #tpu.core_type<tc>, window_params = [{transform_indices = @transform_0, window_bounds = array<i64: 8, 64>}, {pipeline_mode = #tpu.pipeline_mode<synchronous>, transform_indices = @transform_1, window_bounds = array<i64: 64, 256>}, {pipeline_mode = #tpu.pipeline_mode<synchronous>, transform_indices = @transform_2, window_bounds = array<i64: 1, 256>}, {pipeline_mode = #tpu.pipeline_mode<synchronous>, transform_indices = @transform_3, window_bounds = array<i64: 256, 128>}, {pipeline_mode = #tpu.pipeline_mode<synchronous>, transform_indices = @transform_4, window_bounds = array<i64: 1, 128>}, {pipeline_mode = #tpu.pipeline_mode<synchronous>, transform_indices = @transform_5, window_bounds = array<i64: 128, 128>}, {transform_indices = @transform_6, window_bounds = array<i64: 8, 128>}]} {
    %c0 = arith.constant 0 : index
    %c0_0 = arith.constant 0 : index
    %0 = vector.load %arg1[%c0, %c0_0] : memref<8x64xf32, #tpu.memory_space<vmem>>, vector<8x64xf32>
    %1 = arith.truncf %0 : vector<8x64xf32> to vector<8x64xbf16>
    %c0_1 = arith.constant 0 : index
    %c0_2 = arith.constant 0 : index
    %2 = vector.load %arg2[%c0_1, %c0_2] : memref<64x256xbf16, #tpu.memory_space<vmem>>, vector<64x256xbf16>
    %cst = arith.constant dense<0.000000e+00> : vector<8x256xf32>
    %3 = tpu.matmul %1, %2, %cst {dimension_numbers = #tpu.dot_dimension_numbers<[1], [0], [0], [1], [0, 0, 1, 1], [], []>} : vector<8x64xbf16>, vector<64x256xbf16>, vector<8x256xf32> -> vector<8x256xf32>
    %c0_3 = arith.constant 0 : index
    %c0_4 = arith.constant 0 : index
    %4 = vector.load %arg3[%c0_3, %c0_4] : memref<1x256xf32, #tpu.memory_space<vmem>>, vector<1x256xf32>
    %5 = vector.broadcast %4 : vector<1x256xf32> to vector<8x256xf32>
    %6 = arith.addf %3, %5 : vector<8x256xf32>
    %cst_5 = arith.constant 0.000000e+00 : f32
    %7 = vector.broadcast %cst_5 : f32 to vector<8x256xf32>
    %8 = arith.maximumf %6, %7 : vector<8x256xf32>
    %9 = arith.truncf %8 : vector<8x256xf32> to vector<8x256xbf16>
    %c0_6 = arith.constant 0 : index
    %c0_7 = arith.constant 0 : index
    %10 = vector.load %arg4[%c0_6, %c0_7] : memref<256x128xbf16, #tpu.memory_space<vmem>>, vector<256x128xbf16>
    %cst_8 = arith.constant dense<0.000000e+00> : vector<8x128xf32>
    %11 = tpu.matmul %9, %10, %cst_8 {dimension_numbers = #tpu.dot_dimension_numbers<[1], [0], [0], [1], [0, 0, 1, 1], [], []>} : vector<8x256xbf16>, vector<256x128xbf16>, vector<8x128xf32> -> vector<8x128xf32>
    %c0_9 = arith.constant 0 : index
    %c0_10 = arith.constant 0 : index
    %12 = vector.load %arg5[%c0_9, %c0_10] : memref<1x128xf32, #tpu.memory_space<vmem>>, vector<1x128xf32>
    %13 = vector.broadcast %12 : vector<1x128xf32> to vector<8x128xf32>
    %14 = arith.addf %11, %13 : vector<8x128xf32>
    %cst_11 = arith.constant 0.000000e+00 : f32
    %15 = vector.broadcast %cst_11 : f32 to vector<8x128xf32>
    %16 = arith.maximumf %14, %15 : vector<8x128xf32>
    %17 = arith.mulf %16, %16 : vector<8x128xf32>
    %cst_12 = arith.constant dense<0.000000e+00> : vector<8xf32>
    %18 = vector.multi_reduction <add>, %17, %cst_12 [1] : vector<8x128xf32> to vector<8xf32>
    %19 = vector.shape_cast %18 : vector<8xf32> to vector<8x1xf32>
    %cst_13 = arith.constant 1.000000e-24 : f32
    %20 = vector.broadcast %cst_13 : f32 to vector<8x1xf32>
    %21 = arith.maximumf %19, %20 : vector<8x1xf32>
    %22 = math.rsqrt %21 : vector<8x1xf32>
    %23 = vector.broadcast %22 : vector<8x1xf32> to vector<8x128xf32>
    %24 = arith.mulf %16, %23 : vector<8x128xf32>
    %25 = arith.mulf %22, %22 : vector<8x1xf32>
    %26 = arith.mulf %19, %25 : vector<8x1xf32>
    %c0_14 = arith.constant 0 : index
    %c0_15 = arith.constant 0 : index
    %27 = vector.load %arg6[%c0_14, %c0_15] : memref<128x128xf32, #tpu.memory_space<vmem>>, vector<128x128xf32>
    %cst_16 = arith.constant dense<0.000000e+00> : vector<8x128xf32>
    %28 = tpu.matmul %24, %27, %cst_16 {dimension_numbers = #tpu.dot_dimension_numbers<[1], [0], [0], [1], [0, 0, 1, 1], [], []>} : vector<8x128xf32>, vector<128x128xf32>, vector<8x128xf32> -> vector<8x128xf32>
    %cst_17 = arith.constant 1.000000e+00 : f32
    %29 = vector.broadcast %cst_17 : f32 to vector<8x1xf32>
    %30 = arith.addf %26, %29 : vector<8x1xf32>
    %cst_18 = arith.constant 2.000000e+00 : f32
    %31 = vector.broadcast %cst_18 : f32 to vector<8x128xf32>
    %32 = arith.mulf %31, %28 : vector<8x128xf32>
    %33 = vector.broadcast %30 : vector<8x1xf32> to vector<8x128xf32>
    %34 = arith.subf %33, %32 : vector<8x128xf32>
    %cst_19 = arith.constant 5.000000e-01 : f32
    %35 = vector.broadcast %cst_19 : f32 to vector<8x128xf32>
    %36 = arith.mulf %35, %34 : vector<8x128xf32>
    %cst_20 = arith.constant 0.000000e+00 : f32
    %37 = vector.broadcast %cst_20 : f32 to vector<8x128xf32>
    %38 = arith.maximumf %36, %37 : vector<8x128xf32>
    %39 = math.sqrt %38 : vector<8x128xf32>
    %40 = tpu.iota {dimensions = array<i32: 1>} : vector<1x128xi32>
    %c16_i32 = arith.constant 16 : i32
    %41 = vector.broadcast %c16_i32 : i32 to vector<1x128xi32>
    %42 = arith.cmpi slt, %40, %41 : vector<1x128xi32>
    %cst_21 = arith.constant 0.000000e+00 : f32
    %43 = vector.shape_cast %42 : vector<1x128xi1> to vector<1x128xi1>
    %44 = vector.broadcast %43 : vector<1x128xi1> to vector<8x128xi1>
    %45 = vector.broadcast %cst_21 : f32 to vector<8x128xf32>
    %46 = arith.select %44, %39, %45 : vector<8x128xi1>, vector<8x128xf32>
    %cst_22 = arith.constant dense<0.000000e+00> : vector<8xf32>
    %47 = vector.multi_reduction <add>, %46, %cst_22 [1] : vector<8x128xf32> to vector<8xf32>
    %48 = vector.shape_cast %47 : vector<8xf32> to vector<8x1xf32>
    %cst_23 = arith.constant 6.250000e-02 : f32
    %49 = vector.broadcast %cst_23 : f32 to vector<8x1xf32>
    %50 = arith.mulf %48, %49 : vector<8x1xf32>
    %51 = vector.broadcast %50 : vector<8x1xf32> to vector<8x128xf32>
    %52 = arith.addf %39, %51 : vector<8x128xf32>
    %cst_24 = arith.constant -1.000000e+00 : f32
    %53 = vector.broadcast %cst_24 : f32 to vector<8x128xf32>
    %54 = arith.mulf %53, %52 : vector<8x128xf32>
    %c0_25 = arith.constant 0 : index
    %c0_26 = arith.constant 0 : index
    %55 = vector.load %arg7[%c0_25, %c0_26] : memref<8x128xf32, #tpu.memory_space<vmem>>, vector<8x128xf32>
    tpu.vector_store %arg7[%c0_25, %c0_26], %54 {strides = array<i32>} : memref<8x128xf32, #tpu.memory_space<vmem>>, vector<8x128xf32>,
    return
  }
  func.func @transform_0(%arg0: i32) -> (i32, i32) {
    %c0_i32 = arith.constant 0 : i32
    %c0_i32_0 = arith.constant 0 : i32
    return %arg0, %c0_i32 : i32, i32
  }
  func.func @transform_1(%arg0: i32) -> (i32, i32) {
    %c0_i32 = arith.constant 0 : i32
    %c0_i32_0 = arith.constant 0 : i32
    %c0_i32_1 = arith.constant 0 : i32
    return %c0_i32, %c0_i32_0 : i32, i32
  }
  func.func @transform_2(%arg0: i32) -> (i32, i32) {
    %c0_i32 = arith.constant 0 : i32
    %c0_i32_0 = arith.constant 0 : i32
    %c0_i32_1 = arith.constant 0 : i32
    return %c0_i32, %c0_i32_0 : i32, i32
  }
  func.func @transform_3(%arg0: i32) -> (i32, i32) {
    %c0_i32 = arith.constant 0 : i32
    %c0_i32_0 = arith.constant 0 : i32
    %c0_i32_1 = arith.constant 0 : i32
    return %c0_i32, %c0_i32_0 : i32, i32
  }
  func.func @transform_4(%arg0: i32) -> (i32, i32) {
    %c0_i32 = arith.constant 0 : i32
    %c0_i32_0 = arith.constant 0 : i32
    %c0_i32_1 = arith.constant 0 : i32
    return %c0_i32, %c0_i32_0 : i32, i32
  }
  func.func @transform_5(%arg0: i32) -> (i32, i32) {
    %c0_i32 = arith.constant 0 : i32
    %c0_i32_0 = arith.constant 0 : i32
    %c0_i32_1 = arith.constant 0 : i32
    return %c0_i32, %c0_i32_0 : i32, i32
  }
  func.func @transform_6(%arg0: i32) -> (i32, i32) {
    %c0_i32 = arith.constant 0 : i32
    %c0_i32_0 = arith.constant 0 : i32
    return %arg0, %c0_i32 : i32, i32
  }
}

</mosaic_0001>

<llo_original>
// kernel: tpu_custom_call.1
$region0: #{tpu_custom_call.1}
  #allocation0 [shape = 'u32[]', space=smem, size = 0x4, offset = 0x4, fixed_abs, tag = 'smem constant byte address 0x4 - core index']
  #allocation1 [shape = 'u32[144,128]{1,0:T(1,128)}', space=vmem, size = 0x12000, scoped, tag = 'internal scratch']
  %s0 = inlined_call_operand.hbm [shape: f32[8,64], index: 0, kind: input, shape index: {}]
  %s1 = inlined_call_operand.hbm [shape: bf16[64,256], index: 1, kind: input, shape index: {}]
  %s2 = inlined_call_operand.vmem [shape: f32[1,256], index: 2, kind: input, shape index: {}]
  %s3 = inlined_call_operand.hbm [shape: bf16[256,128], index: 3, kind: input, shape index: {}]
  %s4 = inlined_call_operand.vmem [shape: f32[1,128], index: 4, kind: input, shape index: {}]
  %s5 = inlined_call_operand.hbm [shape: f32[128,128], index: 5, kind: input, shape index: {}]
  %s6 = inlined_call_operand.hbm [shape: f32[8,128], index: 6, kind: output, shape index: {}]
  %s7 = sld [smem:[#allocation0]]
  $region50: #{tpu_custom_call.1} parent=0
    _
  %s9 = ssub.s32 1, %s7
  %s10 = scalar_select 0, %s9, %s7
  $region1: #{tpu_custom_call.1} parent=0
    #allocation2 [shape = 'u8[4096]{0}', space=vmem, size = 0x1000, scoped, tag = 'input window, operand 0, single buffered']
    #allocation3 [shape = 's32[1]{0}', space=sflag, size = 0x4, scoped, tag = 'scoped memory for tpu_custom_call.1']
    #allocation4 [shape = 's32[1]{0}', space=sflag, size = 0x4, scoped, tag = 'scoped memory for tpu_custom_call.1']
    #allocation5 [shape = 'u8[32768]{0}', space=vmem, size = 0x8000, scoped, tag = 'input window, operand 1, single buffered']
    #allocation6 [shape = 's32[1]{0}', space=sflag, size = 0x4, scoped, tag = 'scoped memory for tpu_custom_call.1']
    #allocation7 [shape = 'u8[65536]{0}', space=vmem, size = 0x10000, scoped, tag = 'input window, operand 3, single buffered']
    #allocation8 [shape = 'u8[65536]{0}', space=vmem, size = 0x10000, scoped, tag = 'input window, operand 5, single buffered']
    #allocation9 [shape = 's32[1]{0}', space=sflag, size = 0x4, scoped, tag = 'scoped memory for tpu_custom_call.1']
    #allocation10 [shape = 'u8[4096]{0}', space=vmem, size = 0x1000, scoped, tag = 'output window, operand 0, single buffered']
    %11 = vsyncpa [#allocation3], 0
    %12 = vsyncpa [#allocation6], 0
    %13 = vsyncpa [#allocation9], 0
    %14 = vsyncpa [#allocation4], 0
    // Predicated region
    $region2: #{tpu_custom_call.1} parent=1 // pred_check
      _
    $region3: #{tpu_custom_call.1} parent=1 // pred_check_branch
      %16 = sbr.rel (0) target = $region5
    $region4: #{tpu_custom_call.1} parent=1 // pred_region
      %s18 = ssub.s32 128, 128
      %19 = vsyncadd [#allocation3], %s18
      %s21 = sshll.u32 [#allocation2], 4
      %s22 = int_to_ptr.vmem [resolvable:$true] %s21
      %24 = dma.hbm_to_vmem [thread:$0]  %s0, 128, %s22, [#allocation3]
    $region5: #{tpu_custom_call.1} parent=1 // pred_fallthru
      _
    // Predicated region
    $region6: #{tpu_custom_call.1} parent=1 // pred_check
      _
    $region7: #{tpu_custom_call.1} parent=1 // pred_check_branch
      %26 = sbr.rel (0) target = $region9
    $region8: #{tpu_custom_call.1} parent=1 // pred_region
      %s28 = ssub.s32 1024, 1024
      %29 = vsyncadd [#allocation6], %s28
      %s30 = sshll.u32 [#allocation5], 4
      %s31 = int_to_ptr.vmem [resolvable:$true] %s30
      %36 = dma.hbm_to_vmem [thread:$0]  %s1, 1024, %s31, [#allocation6], 128, 128, 8
    $region9: #{tpu_custom_call.1} parent=1 // pred_fallthru
      _
    // Predicated region
    $region10: #{tpu_custom_call.1} parent=1 // pred_check
      _
    $region11: #{tpu_custom_call.1} parent=1 // pred_check_branch
      %38 = sbr.rel (0) target = $region13
    $region12: #{tpu_custom_call.1} parent=1 // pred_region
      _
    $region13: #{tpu_custom_call.1} parent=1 // pred_fallthru
      _
    // Predicated region
    $region14: #{tpu_custom_call.1} parent=1 // pred_check
      _
    $region15: #{tpu_custom_call.1} parent=1 // pred_check_branch
      %40 = sbr.rel (0) target = $region17
    $region16: #{tpu_custom_call.1} parent=1 // pred_region
      %s42 = ssub.s32 2048, 2048
      %43 = vsyncadd [#allocation6], %s42
      %s44 = sshll.u32 [#allocation7], 4
      %s45 = int_to_ptr.vmem [resolvable:$true] %s44
      %50 = dma.hbm_to_vmem [thread:$0]  %s3, 2048, %s45, [#allocation6], 64, 64, 4
    $region17: #{tpu_custom_call.1} parent=1 // pred_fallthru
      _
    // Predicated region
    $region18: #{tpu_custom_call.1} parent=1 // pred_check
      _
    $region19: #{tpu_custom_call.1} parent=1 // pred_check_branch
      %52 = sbr.rel (0) target = $region21
    $region20: #{tpu_custom_call.1} parent=1 // pred_region
      _
    $region21: #{tpu_custom_call.1} parent=1 // pred_fallthru
      _
    // Predicated region
    $region22: #{tpu_custom_call.1} parent=1 // pred_check
      _
    $region23: #{tpu_custom_call.1} parent=1 // pred_check_branch
      %54 = sbr.rel (0) target = $region25
    $region24: #{tpu_custom_call.1} parent=1 // pred_region
      %s56 = ssub.s32 2048, 2048
      %57 = vsyncadd [#allocation9], %s56
      %s58 = sshll.u32 [#allocation8], 4
      %s59 = int_to_ptr.vmem [resolvable:$true] %s58
      %64 = dma.hbm_to_vmem [thread:$0]  %s5, 2048, %s59, [#allocation9], 128, 128, 8
    $region25: #{tpu_custom_call.1} parent=1 // pred_fallthru
      _
    // Predicated region
    $region26: #{tpu_custom_call.1} parent=1 // pred_check
      _
    $region27: #{tpu_custom_call.1} parent=1 // pred_check_branch
      %66 = sbr.rel (0) target = $region29
    $region28: #{tpu_custom_call.1} parent=1 // pred_region
      %67 = dma.done [#allocation3], 128
    $region29: #{tpu_custom_call.1} parent=1 // pred_fallthru
      _
    // Predicated region
    $region30: #{tpu_custom_call.1} parent=1 // pred_check
      _
    $region31: #{tpu_custom_call.1} parent=1 // pred_check_branch
      %69 = sbr.rel (0) target = $region33
    $region32: #{tpu_custom_call.1} parent=1 // pred_region
      %70 = dma.done [#allocation6], 1024
    $region33: #{tpu_custom_call.1} parent=1 // pred_fallthru
      _
    // Predicated region
    $region34: #{tpu_custom_call.1} parent=1 // pred_check
      _
    $region35: #{tpu_custom_call.1} parent=1 // pred_check_branch
      %72 = sbr.rel (0) target = $region37
    $region36: #{tpu_custom_call.1} parent=1 // pred_region
      %73 = dma.done [#allocation6], 2048
    $region37: #{tpu_custom_call.1} parent=1 // pred_fallthru
      _
    // Predicated region
    $region38: #{tpu_custom_call.1} parent=1 // pred_check
      _
    $region39: #{tpu_custom_call.1} parent=1 // pred_check_branch
      %75 = sbr.rel (0) target = $region41
    $region40: #{tpu_custom_call.1} parent=1 // pred_region
      %76 = dma.done [#allocation9], 2048
    $region41: #{tpu_custom_call.1} parent=1 // pred_fallthru
      _
    %v78 = vld [vmem:[#allocation2] sm:$0xff]
    %v79 = vpack.c.bf16 %v78, %v78
    %v80 = vld [vmem:[#allocation5] sm:$0xff]
    %v81 = vld [vmem:[#allocation5 + $0x8] sm:$0xff]
    %v82 = vld [vmem:[#allocation5 + $0x10] sm:$0xff]
    %v83 = vld [vmem:[#allocation5 + $0x18] sm:$0xff]
    %v84 = vld [vmem:[#allocation5 + $0x20] sm:$0xff]
    %v85 = vld [vmem:[#allocation5 + $0x28] sm:$0xff]
    %v86 = vld [vmem:[#allocation5 + $0x30] sm:$0xff]
    %v87 = vld [vmem:[#allocation5 + $0x38] sm:$0xff]
    %v88 = vld [vmem:[%s2] sm:$0x3]
    %v90 = vlaneseq
    %v91 = vshrl.u32 %v90, 7
    %v92 = vsub.s32 0, %v91
    %v93 = vrot.slane %v88, %v92
    %v94 = vlaneseq
    %v95 = vshrl.u32 %v94, 7
    %v96 = vsub.s32 1, %v95
    %v97 = vrot.slane %v88, %v96
    %v108 = vunpack.c.l.b16 %v80
    %v109 = vunpack.c.h.b16 %v80
    %v110 = vunpack.c.l.b16 %v81
    %v111 = vunpack.c.h.b16 %v81
    %v112 = vunpack.c.l.b16 %v82
    %v113 = vunpack.c.h.b16 %v82
    %v114 = vunpack.c.l.b16 %v83
    %v115 = vunpack.c.h.b16 %v83
    %v116 = vunpack.c.l.b16 %v84
    %v117 = vunpack.c.h.b16 %v84
    %v118 = vunpack.c.l.b16 %v85
    %v119 = vunpack.c.h.b16 %v85
    %v120 = vunpack.c.l.b16 %v86
    %v121 = vunpack.c.h.b16 %v86
    %v122 = vunpack.c.l.b16 %v87
    %v123 = vunpack.c.h.b16 %v87
    %v124 = vpack.c.b16 %v110, %v108
    %v125 = vpack.c.b16 %v111, %v109
    %v126 = vpack.c.b16 %v114, %v112
    %v127 = vpack.c.b16 %v115, %v113
    %v128 = vpack.c.b16 %v118, %v116
    %v129 = vpack.c.b16 %v119, %v117
    %v130 = vpack.c.b16 %v122, %v120
    %v131 = vpack.c.b16 %v123, %v121
    %vm140 = vcmask 523264
    %v142 = vsel %vm140, %v79, 0
    %144 = vmatprep.subr.bf16.mxu0 %v125
    %145 = vmatpush1.bf16.msra.mxu0 %v124
    %146 = vmatprep.subr.bf16.mxu0 %v127
    %147 = vmatpush1.bf16.msra.mxu0 %v126
    %148 = vmatprep.subr.bf16.mxu0 %v129
    %149 = vmatpush1.bf16.msra.mxu0 %v128
    %150 = vmatprep.subr.bf16.mxu0 %v131
    %151 = vmatpush1.bf16.msra.mxu0 %v130
    %152 = vmatprep.subr.bf16.mxu0 0
    %153 = vmatpush1.bf16.msra.mxu0 0
    %154 = vmatprep.subr.bf16.mxu0 0
    %155 = vmatpush1.bf16.msra.mxu0 0
    %156 = vmatprep.subr.bf16.mxu0 0
    %157 = vmatpush1.bf16.msra.mxu0 0
    %158 = vmatprep.subr.bf16.mxu0 0
    %159 = vmatpush1.bf16.msra.mxu0 0
    %160 = vmatprep.subr.bf16.mxu0 0
    %161 = vmatpush1.bf16.msra.mxu0 0
    %162 = vmatprep.subr.bf16.mxu0 0
    %163 = vmatpush1.bf16.msra.mxu0 0
    %164 = vmatprep.subr.bf16.mxu0 0
    %165 = vmatpush1.bf16.msra.mxu0 0
    %166 = vmatprep.subr.bf16.mxu0 0
    %167 = vmatpush1.bf16.msra.mxu0 0
    %168 = vmatprep.subr.bf16.mxu0 0
    %169 = vmatpush1.bf16.msra.mxu0 0
    %170 = vmatprep.subr.bf16.mxu0 0
    %171 = vmatpush1.bf16.msra.mxu0 0
    %172 = vmatprep.subr.bf16.mxu0 0
    %173 = vmatpush1.bf16.msra.mxu0 0
    %174 = vmatprep.subr.bf16.mxu0 0
    %175 = vmatpush1.bf16.msra.mxu0 0
    %176 = vmatprep.mubr.bf16.mxu0 0
    %177 = vmatmul.mubr.bf16.gmra.mrb[0].mxu0 %v142
    %v178 = vpop.f32.mrb[0].mxu0
    %v179 = vadd.f32 %v93, %v178
    %v180 = vpop.f32.mrb[0].mxu0
    %v181 = vadd.f32 %v97, %v180
    %v182 = vpop.f32.mrb[0].mxu0
    %v183 = vpop.f32.mrb[0].mxu0
    %184 = vdwg.mxu0
    %v185 = vmax.f32 %v179, 0.0
    %v186 = vmax.f32 %v181, 0.0
    %v187 = vpack.c.bf16 %v185, %v185
    %v188 = vpack.c.bf16 %v186, %v186
    %v189 = vld [vmem:[#allocation7] sm:$0xf]
    %v190 = vld [vmem:[#allocation7 + $0x4] sm:$0xf]
    %v191 = vld [vmem:[#allocation7 + $0x8] sm:$0xf]
    %v192 = vld [vmem:[#allocation7 + $0xc] sm:$0xf]
    %v193 = vld [vmem:[#allocation7 + $0x10] sm:$0xf]
    %v194 = vld [vmem:[#allocation7 + $0x14] sm:$0xf]
    %v195 = vld [vmem:[#allocation7 + $0x18] sm:$0xf]
    %v196 = vld [vmem:[#allocation7 + $0x1c] sm:$0xf]
    %v197 = vld [vmem:[#allocation7 + $0x20] sm:$0xf]
    %v198 = vld [vmem:[#allocation7 + $0x24] sm:$0xf]
    %v199 = vld [vmem:[#allocation7 + $0x28] sm:$0xf]
    %v200 = vld [vmem:[#allocation7 + $0x2c] sm:$0xf]
    %v201 = vld [vmem:[#allocation7 + $0x30] sm:$0xf]
    %v202 = vld [vmem:[#allocation7 + $0x34] sm:$0xf]
    %v203 = vld [vmem:[#allocation7 + $0x38] sm:$0xf]
    %v204 = vld [vmem:[#allocation7 + $0x3c] sm:$0xf]
    %v205 = vld [vmem:[#allocation7 + $0x40] sm:$0xf]
    %v206 = vld [vmem:[#allocation7 + $0x44] sm:$0xf]
    %v207 = vld [vmem:[#allocation7 + $0x48] sm:$0xf]
    %v208 = vld [vmem:[#allocation7 + $0x4c] sm:$0xf]
    %v209 = vld [vmem:[#allocation7 + $0x50] sm:$0xf]
    %v210 = vld [vmem:[#allocation7 + $0x54] sm:$0xf]
    %v211 = vld [vmem:[#allocation7 + $0x58] sm:$0xf]
    %v212 = vld [vmem:[#allocation7 + $0x5c] sm:$0xf]
    %v213 = vld [vmem:[#allocation7 + $0x60] sm:$0xf]
    %v214 = vld [vmem:[#allocation7 + $0x64] sm:$0xf]
    %v215 = vld [vmem:[#allocation7 + $0x68] sm:$0xf]
    %v216 = vld [vmem:[#allocation7 + $0x6c] sm:$0xf]
    %v217 = vld [vmem:[#allocation7 + $0x70] sm:$0xf]
    %v218 = vld [vmem:[#allocation7 + $0x74] sm:$0xf]
    %v219 = vld [vmem:[#allocation7 + $0x78] sm:$0xf]
    %v220 = vld [vmem:[#allocation7 + $0x7c] sm:$0xf]
    %v221 = vld [vmem:[%s4] sm:$0x1]
    %v223 = vlaneseq
    %v224 = vshrl.u32 %v223, 7
    %v225 = vsub.s32 0, %v224
    %v226 = vrot.slane %v221, %v225
    %v260 = vunpack.c.l.b16 %v189
    %v261 = vunpack.c.l.b16 %v190
    %v262 = vunpack.c.l.b16 %v191
    %v263 = vunpack.c.l.b16 %v192
    %v264 = vunpack.c.l.b16 %v193
    %v265 = vunpack.c.l.b16 %v194
    %v266 = vunpack.c.l.b16 %v195
    %v267 = vunpack.c.l.b16 %v196
    %v268 = vunpack.c.l.b16 %v197
    %v269 = vunpack.c.l.b16 %v198
    %v270 = vunpack.c.l.b16 %v199
    %v271 = vunpack.c.l.b16 %v200
    %v272 = vunpack.c.l.b16 %v201
    %v273 = vunpack.c.l.b16 %v202
    %v274 = vunpack.c.l.b16 %v203
    %v275 = vunpack.c.l.b16 %v204
    %v276 = vunpack.c.l.b16 %v205
    %v277 = vunpack.c.l.b16 %v206
    %v278 = vunpack.c.l.b16 %v207
    %v279 = vunpack.c.l.b16 %v208
    %v280 = vunpack.c.l.b16 %v209
    %v281 = vunpack.c.l.b16 %v210
    %v282 = vunpack.c.l.b16 %v211
    %v283 = vunpack.c.l.b16 %v212
    %v284 = vunpack.c.l.b16 %v213
    %v285 = vunpack.c.l.b16 %v214
    %v286 = vunpack.c.l.b16 %v215
    %v287 = vunpack.c.l.b16 %v216
    %v288 = vunpack.c.l.b16 %v217
    %v289 = vunpack.c.l.b16 %v218
    %v290 = vunpack.c.l.b16 %v219
    %v291 = vunpack.c.l.b16 %v220
    %v292 = vpack.c.b16 %v261, %v260
    %v293 = vpack.c.b16 %v263, %v262
    %v294 = vpack.c.b16 %v265, %v264
    %v295 = vpack.c.b16 %v267, %v266
    %v296 = vpack.c.b16 %v269, %v268
    %v297 = vpack.c.b16 %v271, %v270
    %v298 = vpack.c.b16 %v273, %v272
    %v299 = vpack.c.b16 %v275, %v274
    %v300 = vpack.c.b16 %v277, %v276
    %v301 = vpack.c.b16 %v279, %v278
    %v302 = vpack.c.b16 %v281, %v280
    %v303 = vpack.c.b16 %v283, %v282
    %v304 = vpack.c.b16 %v285, %v284
    %v305 = vpack.c.b16 %v287, %v286
    %v306 = vpack.c.b16 %v289, %v288
    %v307 = vpack.c.b16 %v291, %v290
    %324 = vmatprep.subr.bf16.mxu0 0
    %325 = vmatpush1.bf16.msra.mxu0 %v292
    %326 = vmatprep.subr.bf16.mxu0 0
    %327 = vmatpush1.bf16.msra.mxu0 %v293
    %328 = vmatprep.subr.bf16.mxu0 0
    %329 = vmatpush1.bf16.msra.mxu0 %v294
    %330 = vmatprep.subr.bf16.mxu0 0
    %331 = vmatpush1.bf16.msra.mxu0 %v295
    %332 = vmatprep.subr.bf16.mxu0 0
    %333 = vmatpush1.bf16.msra.mxu0 %v296
    %334 = vmatprep.subr.bf16.mxu0 0
    %335 = vmatpush1.bf16.msra.mxu0 %v297
    %336 = vmatprep.subr.bf16.mxu0 0
    %337 = vmatpush1.bf16.msra.mxu0 %v298
    %338 = vmatprep.subr.bf16.mxu0 0
    %339 = vmatpush1.bf16.msra.mxu0 %v299
    %340 = vmatprep.subr.bf16.mxu0 0
    %341 = vmatpush1.bf16.msra.mxu0 %v300
    %342 = vmatprep.subr.bf16.mxu0 0
    %343 = vmatpush1.bf16.msra.mxu0 %v301
    %344 = vmatprep.subr.bf16.mxu0 0
    %345 = vmatpush1.bf16.msra.mxu0 %v302
    %346 = vmatprep.subr.bf16.mxu0 0
    %347 = vmatpush1.bf16.msra.mxu0 %v303
    %348 = vmatprep.subr.bf16.mxu0 0
    %349 = vmatpush1.bf16.msra.mxu0 %v304
    %350 = vmatprep.subr.bf16.mxu0 0
    %351 = vmatpush1.bf16.msra.mxu0 %v305
    %352 = vmatprep.subr.bf16.mxu0 0
    %353 = vmatpush1.bf16.msra.mxu0 %v306
    %354 = vmatprep.subr.bf16.mxu0 0
    %355 = vmatpush1.bf16.msra.mxu0 %v307
    %356 = vmatprep.mubr.bf16.mxu0 %v188
    %357 = vmatmul.mubr.bf16.gmra.mrb[0].mxu0 %v187
    %v358 = vpop.f32.mrb[0].mxu0
    %v359 = vadd.f32 %v226, %v358
    %v360 = vpop.f32.mrb[0].mxu0
    %v361 = vpop.f32.mrb[0].mxu0
    %v362 = vpop.f32.mrb[0].mxu0
    %363 = vdwg.mxu0
    %v364 = vmax.f32 %v359, 0.0
    %v365 = vmul.f32 %v364, %v364
    %366 = vadd.xlane.f32.xlu0 %v365
    %v367 = vpop.xlane.xlu0 %366
    %v368 = vmax.f32 %v367, 1e-24
    %v369 = vrsqrt.pop %v368
    %v370 = vmul.f32 %v364, %v369
    %v371 = vmul.f32 %v369, %v369
    %v372 = vmul.f32 %v367, %v371
    %v373 = vld [vmem:[#allocation8] sm:$0xff]
    %v374 = vld [vmem:[#allocation8 + $0x8] sm:$0xff]
    %v375 = vld [vmem:[#allocation8 + $0x10] sm:$0xff]
    %v376 = vld [vmem:[#allocation8 + $0x18] sm:$0xff]
    %v377 = vld [vmem:[#allocation8 + $0x20] sm:$0xff]
    %v378 = vld [vmem:[#allocation8 + $0x28] sm:$0xff]
    %v379 = vld [vmem:[#allocation8 + $0x30] sm:$0xff]
    %v380 = vld [vmem:[#allocation8 + $0x38] sm:$0xff]
    %v381 = vld [vmem:[#allocation8 + $0x40] sm:$0xff]
    %v382 = vld [vmem:[#allocation8 + $0x48] sm:$0xff]
    %v383 = vld [vmem:[#allocation8 + $0x50] sm:$0xff]
    %v384 = vld [vmem:[#allocation8 + $0x58] sm:$0xff]
    %v385 = vld [vmem:[#allocation8 + $0x60] sm:$0xff]
    %v386 = vld [vmem:[#allocation8 + $0x68] sm:$0xff]
    %v387 = vld [vmem:[#allocation8 + $0x70] sm:$0xff]
    %v388 = vld [vmem:[#allocation8 + $0x78] sm:$0xff]
    %389 = vmatprep.subr.mxu0 0.0
    %390 = vmatpush1.msra.mxu0 %v373
    %391 = vmatprep.subr.mxu0 0.0
    %392 = vmatpush1.msra.mxu0 %v374
    %393 = vmatprep.subr.mxu0 0.0
    %394 = vmatpush1.msra.mxu0 %v375
    %395 = vmatprep.subr.mxu0 0.0
    %396 = vmatpush1.msra.mxu0 %v376
    %397 = vmatprep.subr.mxu0 0.0
    %398 = vmatpush1.msra.mxu0 %v377
    %399 = vmatprep.subr.mxu0 0.0
    %400 = vmatpush1.msra.mxu0 %v378
    %401 = vmatprep.subr.mxu0 0.0
    %402 = vmatpush1.msra.mxu0 %v379
    %403 = vmatprep.subr.mxu0 0.0
    %404 = vmatpush1.msra.mxu0 %v380
    %405 = vmatprep.subr.mxu0 0.0
    %406 = vmatpush1.msra.mxu0 %v381
    %407 = vmatprep.subr.mxu0 0.0
    %408 = vmatpush1.msra.mxu0 %v382
    %409 = vmatprep.subr.mxu0 0.0
    %410 = vmatpush1.msra.mxu0 %v383
    %411 = vmatprep.subr.mxu0 0.0
    %412 = vmatpush1.msra.mxu0 %v384
    %413 = vmatprep.subr.mxu0 0.0
    %414 = vmatpush1.msra.mxu0 %v385
    %415 = vmatprep.subr.mxu0 0.0
    %416 = vmatpush1.msra.mxu0 %v386
    %417 = vmatprep.subr.mxu0 0.0
    %418 = vmatpush1.msra.mxu0 %v387
    %419 = vmatprep.subr.mxu0 0.0
    %420 = vmatpush1.msra.mxu0 %v388
    %421 = vmatprep.subr.mxu0 0.0
    %422 = vmatpush1.msra.mxu0 0.0
    %423 = vmatprep.subr.mxu0 0.0
    %424 = vmatpush1.msra.mxu0 0.0
    %425 = vmatprep.subr.mxu0 0.0
    %426 = vmatpush1.msra.mxu0 0.0
    %427 = vmatprep.subr.mxu0 0.0
    %428 = vmatpush1.msra.mxu0 0.0
    %429 = vmatprep.subr.mxu0 0.0
    %430 = vmatpush1.msra.mxu0 0.0
    %431 = vmatprep.subr.mxu0 0.0
    %432 = vmatpush1.msra.mxu0 0.0
    %433 = vmatprep.subr.mxu0 0.0
    %434 = vmatpush1.msra.mxu0 0.0
    %435 = vmatprep.subr.mxu0 0.0
    %436 = vmatpush1.msra.mxu0 0.0
    %437 = vmatprep.subr.mxu0 0.0
    %438 = vmatpush1.msra.mxu0 0.0
    %439 = vmatprep.subr.mxu0 0.0
    %440 = vmatpush1.msra.mxu0 0.0
    %441 = vmatprep.subr.mxu0 0.0
    %442 = vmatpush1.msra.mxu0 0.0
    %443 = vmatprep.subr.mxu0 0.0
    %444 = vmatpush1.msra.mxu0 0.0
    %445 = vmatprep.subr.mxu0 0.0
    %446 = vmatpush1.msra.mxu0 0.0
    %447 = vmatprep.subr.mxu0 0.0
    %448 = vmatpush1.msra.mxu0 0.0
    %449 = vmatprep.subr.mxu0 0.0
    %450 = vmatpush1.msra.mxu0 0.0
    %451 = vmatprep.subr.mxu0 0.0
    %452 = vmatpush1.msra.mxu0 0.0
    %453 = vmatprep.mubr.f32.mxu0 0.0
    %454 = vmatmul.mubr.f32.gmra.mrb[0].mxu0 %v370
    %v455 = vpop.f32.mrb[0].mxu0
    %v456 = vadd.f32 0.0, %v455
    %v457 = vpop.f32.mrb[0].mxu0
    %458 = vdwg.mxu0
    %v459 = vadd.f32 %v372, 1.0
    %v460 = vmul.f32 %v456, 2.0
    %v461 = vsub.f32 %v459, %v460
    %v462 = vmul.f32 %v461, 0.5
    %v463 = vmax.f32 %v462, 0.0
    %v464 = vrsqrt.pop %v463
    %v465 = vmul.f32 %v463, %v464
    %vm466 = vcmp.eq.f32.partialorder %v463, inf
    %v467 = vsel %vm466, %v463, %v465
    %vm468 = vcmp.eq.f32.partialorder %v463, 0.0
    %v469 = vand.u32 %v463, 2147483648
    %v470 = vsel %vm468, %v469, %v467
    %v471 = vlaneseq
    %v472 = vand.u32 %v471, 127
    %vm473 = vcmp.lt.s32.totalorder %v472, 16
    %v474 = vsel %vm473, 1, 0
    %vm475 = vcmp.eq.s32.totalorder %v474, 1
    %v476 = vsel %vm475, %v470, 0.0
    %477 = vadd.xlane.f32.xlu0 %v476
    %v478 = vpop.xlane.xlu0 %477
    %v479 = vmul.f32 %v478, 0.0625
    %v480 = vadd.f32 %v470, %v479
    %v481 = vmul.f32 %v480, -1.0
    %482 = vst [vmem:[#allocation10] sm:$0xff] %v481
    // Predicated region
    $region42: #{tpu_custom_call.1} parent=1 // pred_check
      _
    $region43: #{tpu_custom_call.1} parent=1 // pred_check_branch
      %484 = sbr.rel (0) target = $region45
    $region44: #{tpu_custom_call.1} parent=1 // pred_region
      %s486 = ssub.s32 128, 128
      %487 = vsyncadd [#allocation4], %s486
      %s489 = sshll.u32 [#allocation10], 4
      %s490 = int_to_ptr.vmem [resolvable:$true] %s489
      %492 = dma.vmem_to_hbm [thread:$0]  %s490, 128, %s6, [#allocation4]
    $region45: #{tpu_custom_call.1} parent=1 // pred_fallthru
      _
    // Predicated region
    $region46: #{tpu_custom_call.1} parent=1 // pred_check
      _
    $region47: #{tpu_custom_call.1} parent=1 // pred_check_branch
      %494 = sbr.rel (0) target = $region49
    $region48: #{tpu_custom_call.1} parent=1 // pred_region
      %495 = dma.done [#allocation4], 128
    $region49: #{tpu_custom_call.1} parent=1 // pred_fallthru
      _
    %496 = vsyncpa [#allocation3], 1
    %497 = vsyncpa [#allocation6], 1
    %498 = vsyncpa [#allocation9], 1
    %499 = vsyncpa [#allocation4], 1

</llo_original>
